<compile_context>
chip_gen: v6e
topology: v6e:2x2x1
jax: 0.10.0
libtpu: 0.0.40
codegen_flags: <defaults>
</compile_context>

<pallas_src>
import functools

import jax
import jax.numpy as jnp
from jax import lax
from jax.experimental import pallas as pl
from jax.experimental.pallas import tpu as pltpu


def _round_up(x, m):
    return (x + m - 1) // m * m


def _simclr_loss_kernel(
    q1_ref, q2_ref, keys_ref, loss_x_ref, loss_p_ref,
    acc1_ref, acc2_ref, m1_ref, m2_ref, *,
    batch_valid, b_pad, temperature, static_shift,
):
    """Grid point (i, k): query tile i (both halves) x streamed key tile k.

    q1_ref / q2_ref : [tq, D] bf16, L2-normalized rows of x / x_pair (tile i).
    keys_ref        : [tk, D] bf16, L2-normalized rows of concat([x, x_pair]),
                      pre-scaled by 1/temperature (tile k, streamed over HBM).
    loss_x_ref / loss_p_ref : [tq, 1] per-row losses, written at the last k.
    acc*/m* : VMEM scratch [tq, 1] f32 running exp-sum / running max.
    """
    i = pl.program_id(0)
    k = pl.program_id(1)
    nk = pl.num_programs(1)

    inv_t = jnp.float32(1.0 / temperature)

    q1 = q1_ref[...]                      # bf16 [tq, D]
    q2 = q2_ref[...]
    keys = keys_ref[...]                  # bf16 [tk, D], already * (1/T)

    dn = (((1,), (1,)), ((), ()))         # contract the feature dim of both sides
    # sim = cos(q, key) / T  -- the 1/T factor rides on the key operand.
    sim1 = lax.dot_general(q1, keys, dn, preferred_element_type=jnp.float32)
    sim2 = lax.dot_general(q2, keys, dn, preferred_element_type=jnp.float32)
    tq, tk = sim1.shape

    # Global key-column / query-row indices for masking self & padded columns.
    col = lax.broadcasted_iota(jnp.int32, (tq, tk), 1) + k * tk
    row = lax.broadcasted_iota(jnp.int32, (tq, tk), 0) + i * tq
    col_is_real = (col < batch_valid) | ((col >= b_pad) & (col < b_pad + batch_valid))
    valid1 = col_is_real & (col != row)            # half 1: drop own x column
    valid2 = col_is_real & (col != row + b_pad)    # half 2: drop own pair column

    @pl.when(k == 0)
    def _():
        acc1_ref[...] = jnp.zeros_like(acc1_ref)
        acc2_ref[...] = jnp.zeros_like(acc2_ref)
        if not static_shift:
            m1_ref[...] = jnp.full_like(m1_ref, -1e30)
            m2_ref[...] = jnp.full_like(m2_ref, -1e30)

    if static_shift:
        # cos/T <= 1/T, so a compile-time shift suffices; no XLU max reductions.
        p1 = jnp.where(valid1, jnp.exp(sim1 - inv_t), 0.0)
        p2 = jnp.where(valid2, jnp.exp(sim2 - inv_t), 0.0)
        acc1_ref[...] += jnp.sum(p1, axis=-1, keepdims=True)
        acc2_ref[...] += jnp.sum(p2, axis=-1, keepdims=True)
    else:
        # Flash-style online logsumexp (used only for tiny temperatures).
        neg = jnp.float32(-1e30)
        s1 = jnp.where(valid1, sim1, neg)
        s2 = jnp.where(valid2, sim2, neg)
        m1_new = jnp.maximum(m1_ref[...], jnp.max(s1, axis=-1, keepdims=True))
        m2_new = jnp.maximum(m2_ref[...], jnp.max(s2, axis=-1, keepdims=True))
        p1 = jnp.where(valid1, jnp.exp(sim1 - m1_new), 0.0)
        p2 = jnp.where(valid2, jnp.exp(sim2 - m2_new), 0.0)
        acc1_ref[...] = (acc1_ref[...] * jnp.exp(m1_ref[...] - m1_new)
                         + jnp.sum(p1, axis=-1, keepdims=True))
        acc2_ref[...] = (acc2_ref[...] * jnp.exp(m2_ref[...] - m2_new)
                         + jnp.sum(p2, axis=-1, keepdims=True))
        m1_ref[...] = m1_new
        m2_ref[...] = m2_new

    @pl.when(k == nk - 1)
    def _():
        # Positive logit (shared by both halves): cos(x_j, pair_j) / T.
        q1f = q1.astype(jnp.float32)
        q2f = q2.astype(jnp.float32)
        pos = jnp.sum(q1f * q2f, axis=-1, keepdims=True) * inv_t     # [tq, 1]
        tiny = jnp.float32(1e-37)
        if static_shift:
            lse1 = inv_t + jnp.log(jnp.maximum(acc1_ref[...], tiny))
            lse2 = inv_t + jnp.log(jnp.maximum(acc2_ref[...], tiny))
        else:
            lse1 = m1_ref[...] + jnp.log(jnp.maximum(acc1_ref[...], tiny))
            lse2 = m2_ref[...] + jnp.log(jnp.maximum(acc2_ref[...], tiny))
        r = lax.broadcasted_iota(jnp.int32, (tq, 1), 0) + i * tq
        row_valid = r < batch_valid
        loss_x_ref[...] = jnp.where(row_valid, lse1 - pos, 0.0)
        loss_p_ref[...] = jnp.where(row_valid, lse2 - pos, 0.0)


def simclr_tt_loss(x, x_pair, *, temperature, tq_target=128, tk_target=512,
                   static_shift=None):
    """Pallas TPU implementation of SimCLR_TT_Loss.forward
    (cosine sim_func, N_negative=None)."""
    assert x.ndim == 2 and x.shape == x_pair.shape
    b, d = x.shape
    n = 2 * b

    if static_shift is None:
        # A static logsumexp shift (m = 1/T) is safe unless temperature is tiny.
        static_shift = temperature >= 0.05

    d_pad = _round_up(d, 128)                                # lane alignment
    # Query tile: multiple of 16 (bf16 sublane packing); try for >= 2 tiles so
    # the "parallel" axis can shard across both v7x TensorCores.
    tq = min(_round_up(tq_target, 16),
             _round_up(max(b // 2, 1), 16),
             _round_up(b, 16))
    b_pad = _round_up(b, tq)
    num_q_tiles = b_pad // tq
    # Key tile (streamed along the "arbitrary" grid axis).
    tk = min(_round_up(tk_target, 16), _round_up(2 * b_pad, 16))
    key_rows = _round_up(2 * b_pad, tk)
    num_k_tiles = key_rows // tk

    def _l2_normalize(a):
        a = a.astype(jnp.float32)
        sq = jnp.sum(a * a, axis=-1, keepdims=True)
        # 1 / max(||a||, 1e-8)  (cosine-similarity eps); rsqrt -> EUP.
        return a * lax.rsqrt(jnp.maximum(sq, jnp.float32(1e-16)))

    # One-time normalization / 1/T scaling / bf16 cast in the wrapper.
    xn = jnp.pad(_l2_normalize(x), ((0, b_pad - b), (0, d_pad - d)))
    pn = jnp.pad(_l2_normalize(x_pair), ((0, b_pad - b), (0, d_pad - d)))
    q1 = xn.astype(jnp.bfloat16)
    q2 = pn.astype(jnp.bfloat16)
    keys = (jnp.concatenate([xn, pn], axis=0)
            * jnp.float32(1.0 / temperature)).astype(jnp.bfloat16)
    if key_rows > 2 * b_pad:
        keys = jnp.pad(keys, ((0, key_rows - 2 * b_pad), (0, 0)))

    kernel = functools.partial(
        _simclr_loss_kernel,
        batch_valid=b,
        b_pad=b_pad,
        temperature=temperature,
        static_shift=static_shift,
    )

    q_spec = pl.BlockSpec((tq, d_pad), lambda i, k: (i, 0))     # query tiles
    k_spec = pl.BlockSpec((tk, d_pad), lambda i, k: (k, 0))     # streamed keys
    out_spec = pl.BlockSpec((tq, 1), lambda i, k: (i, 0))       # per-row losses

    loss_x, loss_p = pl.pallas_call(
        kernel,
        grid=(num_q_tiles, num_k_tiles),
        in_specs=[q_spec, q_spec, k_spec],
        out_specs=[out_spec, out_spec],
        out_shape=[jax.ShapeDtypeStruct((b_pad, 1), jnp.float32),
                   jax.ShapeDtypeStruct((b_pad, 1), jnp.float32)],
        scratch_shapes=[pltpu.VMEM((tq, 1), jnp.float32) for _ in range(4)],
        compiler_params=pltpu.CompilerParams(
            dimension_semantics=("parallel", "arbitrary"),
        ),
    )(q1, q2, keys)

    return (jnp.sum(loss_x) + jnp.sum(loss_p)) / jnp.float32(n)


def _reference_loss(x, x_pair, *, temperature):
    """Plain-JAX reference mirroring the PyTorch module (cosine sim_func)."""
    b = x.shape[0]
    n = 2 * b
    z = jnp.concatenate([x, x_pair], axis=0).astype(jnp.float32)
    zn = z / jnp.maximum(jnp.linalg.norm(z, axis=-1, keepdims=True), 1e-8)
    sim = (zn @ zn.T) / temperature
    sim_i_j = jnp.diagonal(sim, offset=b)
    sim_j_i = jnp.diagonal(sim, offset=-b)
    positive = jnp.concatenate([sim_i_j, sim_j_i]).reshape(n, 1)
    mask = jnp.ones((n, n), dtype=bool)
    idx = jnp.arange(n)
    mask = mask.at[idx, idx].set(False)
    mask = mask.at[jnp.arange(b), jnp.arange(b) + b].set(False)
    mask = mask.at[jnp.arange(b) + b, jnp.arange(b)].set(False)
    negative = sim[mask].reshape(n, -1)
    logits = jnp.concatenate([positive, negative], axis=1)
    # CrossEntropyLoss(reduction='sum') with labels == 0, then / N
    lse = jax.scipy.special.logsumexp(logits, axis=1)
    return jnp.sum(lse - logits[:, 0]) / n


if __name__ == "__main__":
    temperature = 0.5
    key = jax.random.PRNGKey(0)
    k1, k2, k3, k4 = jax.random.split(key, 4)

    # Case 1: basic small shape (batch=4, feat=32); single query & key tile.
    x = jax.random.normal(k1, (4, 32), dtype=jnp.float32)
    x_pair = jax.random.normal(k2, (4, 32), dtype=jnp.float32)
    loss = jax.block_until_ready(simclr_tt_loss(x, x_pair, temperature=temperature))
    ref = _reference_loss(x, x_pair, temperature=temperature)
    # bf16 MXU operands (f32 accumulation) => bf16-level comparison tolerance.
    assert jnp.allclose(loss, ref, rtol=1e-2, atol=1e-2), (loss, ref)

    # Case 2: multi query-tile AND multi key-tile grid with row/col padding
    # (batch=20 -> b_pad=32, 2 query tiles; tk=16 -> 4 streamed key tiles).
    x2 = jax.random.normal(k3, (20, 40), dtype=jnp.float32)
    x2_pair = jax.random.normal(k4, (20, 40), dtype=jnp.float32)
    loss2 = jax.block_until_ready(
        simclr_tt_loss(x2, x2_pair, temperature=temperature,
                       tq_target=16, tk_target=16))
    ref2 = _reference_loss(x2, x2_pair, temperature=temperature)
    assert jnp.allclose(loss2, ref2, rtol=1e-2, atol=1e-2), (loss2, ref2)

    # Case 3: exercise the dynamic-max (flash-style online logsumexp) fallback
    # that is selected automatically for very small temperatures.
    loss3 = jax.block_until_ready(
        simclr_tt_loss(x2, x2_pair, temperature=temperature,
                       tq_target=16, tk_target=32, static_shift=False))
    assert jnp.allclose(loss3, ref2, rtol=1e-2, atol=1e-2), (loss3, ref2)

    print("KERNEL_OK")
</pallas_src>

<mosaic_0001>
module attributes {stable_mosaic.version = 11 : i64} {
  func.func @_simclr_loss_kernel(%arg0: i32, %arg1: i32, %arg2: memref<16x128xbf16, #tpu.memory_space<vmem>>, %arg3: memref<16x128xbf16, #tpu.memory_space<vmem>>, %arg4: memref<32x128xbf16, #tpu.memory_space<vmem>>, %arg5: memref<16x1xf32, #tpu.memory_space<vmem>>, %arg6: memref<16x1xf32, #tpu.memory_space<vmem>>, %arg7: memref<16x1xf32, #tpu.memory_space<vmem>>, %arg8: memref<16x1xf32, #tpu.memory_space<vmem>>, %arg9: memref<16x1xf32, #tpu.memory_space<vmem>>, %arg10: memref<16x1xf32, #tpu.memory_space<vmem>>) attributes {dimension_semantics = [#tpu.dimension_semantics<parallel>, #tpu.dimension_semantics<arbitrary>], iteration_bounds = array<i64: 1, 1>, scalar_prefetch = 0 : i64, scratch_operands = 4 : i64, tpu.core_type = #tpu.core_type<tc>, window_params = [{transform_indices = @transform_0, window_bounds = array<i64: 16, 128>}, {transform_indices = @transform_1, window_bounds = array<i64: 16, 128>}, {transform_indices = @transform_2, window_bounds = array<i64: 32, 128>}, {transform_indices = @transform_3, window_bounds = array<i64: 16, 1>}, {transform_indices = @transform_4, window_bounds = array<i64: 16, 1>}]} {
    %c0 = arith.constant 0 : index
    %c0_0 = arith.constant 0 : index
    %0 = vector.load %arg2[%c0, %c0_0] : memref<16x128xbf16, #tpu.memory_space<vmem>>, vector<16x128xbf16>
    %c0_1 = arith.constant 0 : index
    %c0_2 = arith.constant 0 : index
    %1 = vector.load %arg3[%c0_1, %c0_2] : memref<16x128xbf16, #tpu.memory_space<vmem>>, vector<16x128xbf16>
    %c0_3 = arith.constant 0 : index
    %c0_4 = arith.constant 0 : index
    %2 = vector.load %arg4[%c0_3, %c0_4] : memref<32x128xbf16, #tpu.memory_space<vmem>>, vector<32x128xbf16>
    %cst = arith.constant dense<0.000000e+00> : vector<16x32xf32>
    %3 = tpu.matmul %0, %2, %cst {dimension_numbers = #tpu.dot_dimension_numbers<[1], [1], [0], [0], [0, 0, 1, 0], [], []>} : vector<16x128xbf16>, vector<32x128xbf16>, vector<16x32xf32> -> vector<16x32xf32>
    %cst_5 = arith.constant dense<0.000000e+00> : vector<16x32xf32>
    %4 = tpu.matmul %1, %2, %cst_5 {dimension_numbers = #tpu.dot_dimension_numbers<[1], [1], [0], [0], [0, 0, 1, 0], [], []>} : vector<16x128xbf16>, vector<32x128xbf16>, vector<16x32xf32> -> vector<16x32xf32>
    %5 = tpu.iota {dimensions = array<i32: 1>} : vector<16x32xi32>
    %c32_i32 = arith.constant 32 : i32
    %6 = arith.muli %arg1, %c32_i32 : i32
    %7 = vector.broadcast %6 : i32 to vector<16x32xi32>
    %8 = arith.addi %5, %7 : vector<16x32xi32>
    %9 = tpu.iota {dimensions = array<i32: 0>} : vector<16x32xi32>
    %c16_i32 = arith.constant 16 : i32
    %10 = arith.muli %arg0, %c16_i32 : i32
    %11 = vector.broadcast %10 : i32 to vector<16x32xi32>
    %12 = arith.addi %9, %11 : vector<16x32xi32>
    %c4_i32 = arith.constant 4 : i32
    %13 = vector.broadcast %c4_i32 : i32 to vector<16x32xi32>
    %14 = arith.cmpi slt, %8, %13 : vector<16x32xi32>
    %c16_i32_6 = arith.constant 16 : i32
    %15 = vector.broadcast %c16_i32_6 : i32 to vector<16x32xi32>
    %16 = arith.cmpi sge, %8, %15 : vector<16x32xi32>
    %c20_i32 = arith.constant 20 : i32
    %17 = vector.broadcast %c20_i32 : i32 to vector<16x32xi32>
    %18 = arith.cmpi slt, %8, %17 : vector<16x32xi32>
    %19 = arith.andi %16, %18 : vector<16x32xi1>
    %20 = arith.ori %14, %19 : vector<16x32xi1>
    %21 = arith.cmpi ne, %8, %12 : vector<16x32xi32>
    %22 = arith.andi %20, %21 : vector<16x32xi1>
    %c16_i32_7 = arith.constant 16 : i32
    %23 = vector.broadcast %c16_i32_7 : i32 to vector<16x32xi32>
    %24 = arith.addi %12, %23 : vector<16x32xi32>
    %25 = arith.cmpi ne, %8, %24 : vector<16x32xi32>
    %26 = arith.andi %20, %25 : vector<16x32xi1>
    %c0_i32 = arith.constant 0 : i32
    %27 = arith.cmpi eq, %arg1, %c0_i32 : i32
    %28 = arith.extui %27 : i1 to i32
    %c0_i32_8 = arith.constant 0 : i32
    %29 = arith.cmpi ne, %28, %c0_i32_8 : i32
    scf.if %29 {
      %cst_26 = arith.constant 0.000000e+00 : f32
      %53 = vector.broadcast %cst_26 : f32 to vector<16x1xf32>
      %c0_27 = arith.constant 0 : index
      %c0_28 = arith.constant 0 : index
      %54 = vector.load %arg7[%c0_27, %c0_28] : memref<16x1xf32, #tpu.memory_space<vmem>>, vector<16x1xf32>
      tpu.vector_store %arg7[%c0_27, %c0_28], %53 {strides = array<i32>} : memref<16x1xf32, #tpu.memory_space<vmem>>, vector<16x1xf32>,
      %cst_29 = arith.constant 0.000000e+00 : f32
      %55 = vector.broadcast %cst_29 : f32 to vector<16x1xf32>
      %c0_30 = arith.constant 0 : index
      %c0_31 = arith.constant 0 : index
      %56 = vector.load %arg8[%c0_30, %c0_31] : memref<16x1xf32, #tpu.memory_space<vmem>>, vector<16x1xf32>
      tpu.vector_store %arg8[%c0_30, %c0_31], %55 {strides = array<i32>} : memref<16x1xf32, #tpu.memory_space<vmem>>, vector<16x1xf32>,
    } else {
    }
    %cst_9 = arith.constant 2.000000e+00 : f32
    %30 = vector.broadcast %cst_9 : f32 to vector<16x32xf32>
    %31 = arith.subf %3, %30 : vector<16x32xf32>
    %32 = math.exp %31 : vector<16x32xf32>
    %cst_10 = arith.constant 0.000000e+00 : f32
    %33 = vector.broadcast %cst_10 : f32 to vector<16x32xf32>
    %34 = arith.select %22, %32, %33 : vector<16x32xi1>, vector<16x32xf32>
    %cst_11 = arith.constant 2.000000e+00 : f32
    %35 = vector.broadcast %cst_11 : f32 to vector<16x32xf32>
    %36 = arith.subf %4, %35 : vector<16x32xf32>
    %37 = math.exp %36 : vector<16x32xf32>
    %cst_12 = arith.constant 0.000000e+00 : f32
    %38 = vector.broadcast %cst_12 : f32 to vector<16x32xf32>
    %39 = arith.select %26, %37, %38 : vector<16x32xi1>, vector<16x32xf32>
    %c0_13 = arith.constant 0 : index
    %c0_14 = arith.constant 0 : index
    %40 = vector.load %arg7[%c0_13, %c0_14] : memref<16x1xf32, #tpu.memory_space<vmem>>, vector<16x1xf32>
    %cst_15 = arith.constant dense<0.000000e+00> : vector<16xf32>
    %41 = vector.multi_reduction <add>, %34, %cst_15 [1] : vector<16x32xf32> to vector<16xf32>
    %42 = vector.shape_cast %41 : vector<16xf32> to vector<16x1xf32>
    %43 = arith.addf %40, %42 : vector<16x1xf32>
    %c0_16 = arith.constant 0 : index
    %c0_17 = arith.constant 0 : index
    %44 = vector.load %arg7[%c0_16, %c0_17] : memref<16x1xf32, #tpu.memory_space<vmem>>, vector<16x1xf32>
    tpu.vector_store %arg7[%c0_16, %c0_17], %43 {strides = array<i32>} : memref<16x1xf32, #tpu.memory_space<vmem>>, vector<16x1xf32>,
    %c0_18 = arith.constant 0 : index
    %c0_19 = arith.constant 0 : index
    %45 = vector.load %arg8[%c0_18, %c0_19] : memref<16x1xf32, #tpu.memory_space<vmem>>, vector<16x1xf32>
    %cst_20 = arith.constant dense<0.000000e+00> : vector<16xf32>
    %46 = vector.multi_reduction <add>, %39, %cst_20 [1] : vector<16x32xf32> to vector<16xf32>
    %47 = vector.shape_cast %46 : vector<16xf32> to vector<16x1xf32>
    %48 = arith.addf %45, %47 : vector<16x1xf32>
    %c0_21 = arith.constant 0 : index
    %c0_22 = arith.constant 0 : index
    %49 = vector.load %arg8[%c0_21, %c0_22] : memref<16x1xf32, #tpu.memory_space<vmem>>, vector<16x1xf32>
    tpu.vector_store %arg8[%c0_21, %c0_22], %48 {strides = array<i32>} : memref<16x1xf32, #tpu.memory_space<vmem>>, vector<16x1xf32>,
    %c0_i32_23 = arith.constant 0 : i32
    %50 = arith.cmpi eq, %arg1, %c0_i32_23 : i32
    %51 = arith.extui %50 : i1 to i32
    %cst_24 = arith.constant 2.000000e+00 : f32
    %c0_i32_25 = arith.constant 0 : i32
    %52 = arith.cmpi ne, %51, %c0_i32_25 : i32
    scf.if %52 {
      %53 = arith.extf %0 : vector<16x128xbf16> to vector<16x128xf32>
      %54 = arith.extf %1 : vector<16x128xbf16> to vector<16x128xf32>
      %55 = arith.mulf %53, %54 : vector<16x128xf32>
      %cst_26 = arith.constant dense<0.000000e+00> : vector<16xf32>
      %56 = vector.multi_reduction <add>, %55, %cst_26 [1] : vector<16x128xf32> to vector<16xf32>
      %57 = vector.shape_cast %56 : vector<16xf32> to vector<16x1xf32>
      %58 = vector.broadcast %cst_24 : f32 to vector<16x1xf32>
      %59 = arith.mulf %57, %58 : vector<16x1xf32>
      %c0_27 = arith.constant 0 : index
      %c0_28 = arith.constant 0 : index
      %60 = vector.load %arg7[%c0_27, %c0_28] : memref<16x1xf32, #tpu.memory_space<vmem>>, vector<16x1xf32>
      %cst_29 = arith.constant 9.99999991E-38 : f32
      %61 = vector.broadcast %cst_29 : f32 to vector<16x1xf32>
      %62 = arith.maximumf %60, %61 : vector<16x1xf32>
      %63 = math.log %62 : vector<16x1xf32>
      %64 = vector.broadcast %cst_24 : f32 to vector<16x1xf32>
      %65 = arith.addf %64, %63 : vector<16x1xf32>
      %c0_30 = arith.constant 0 : index
      %c0_31 = arith.constant 0 : index
      %66 = vector.load %arg8[%c0_30, %c0_31] : memref<16x1xf32, #tpu.memory_space<vmem>>, vector<16x1xf32>
      %cst_32 = arith.constant 9.99999991E-38 : f32
      %67 = vector.broadcast %cst_32 : f32 to vector<16x1xf32>
      %68 = arith.maximumf %66, %67 : vector<16x1xf32>
      %69 = math.log %68 : vector<16x1xf32>
      %70 = vector.broadcast %cst_24 : f32 to vector<16x1xf32>
      %71 = arith.addf %70, %69 : vector<16x1xf32>
      %72 = tpu.iota {dimensions = array<i32: 0>} : vector<16x1xi32>
      %c16_i32_33 = arith.constant 16 : i32
      %73 = arith.muli %arg0, %c16_i32_33 : i32
      %74 = vector.broadcast %73 : i32 to vector<16x1xi32>
      %75 = arith.addi %72, %74 : vector<16x1xi32>
      %c4_i32_34 = arith.constant 4 : i32
      %76 = vector.broadcast %c4_i32_34 : i32 to vector<16x1xi32>
      %77 = arith.cmpi slt, %75, %76 : vector<16x1xi32>
      %78 = arith.subf %65, %59 : vector<16x1xf32>
      %cst_35 = arith.constant 0.000000e+00 : f32
      %79 = vector.broadcast %cst_35 : f32 to vector<16x1xf32>
      %80 = arith.select %77, %78, %79 : vector<16x1xi1>, vector<16x1xf32>
      %c0_36 = arith.constant 0 : index
      %c0_37 = arith.constant 0 : index
      %81 = vector.load %arg5[%c0_36, %c0_37] : memref<16x1xf32, #tpu.memory_space<vmem>>, vector<16x1xf32>
      tpu.vector_store %arg5[%c0_36, %c0_37], %80 {strides = array<i32>} : memref<16x1xf32, #tpu.memory_space<vmem>>, vector<16x1xf32>,
      %82 = arith.subf %71, %59 : vector<16x1xf32>
      %cst_38 = arith.constant 0.000000e+00 : f32
      %83 = vector.broadcast %cst_38 : f32 to vector<16x1xf32>
      %84 = arith.select %77, %82, %83 : vector<16x1xi1>, vector<16x1xf32>
      %c0_39 = arith.constant 0 : index
      %c0_40 = arith.constant 0 : index
      %85 = vector.load %arg6[%c0_39, %c0_40] : memref<16x1xf32, #tpu.memory_space<vmem>>, vector<16x1xf32>
      tpu.vector_store %arg6[%c0_39, %c0_40], %84 {strides = array<i32>} : memref<16x1xf32, #tpu.memory_space<vmem>>, vector<16x1xf32>,
    } else {
    }
    return
  }
  func.func @transform_0(%arg0: i32, %arg1: i32) -> (i32, i32) {
    %c0_i32 = arith.constant 0 : i32
    %c0_i32_0 = arith.constant 0 : i32
    return %arg0, %c0_i32 : i32, i32
  }
  func.func @transform_1(%arg0: i32, %arg1: i32) -> (i32, i32) {
    %c0_i32 = arith.constant 0 : i32
    %c0_i32_0 = arith.constant 0 : i32
    return %arg0, %c0_i32 : i32, i32
  }
  func.func @transform_2(%arg0: i32, %arg1: i32) -> (i32, i32) {
    %c0_i32 = arith.constant 0 : i32
    %c0_i32_0 = arith.constant 0 : i32
    return %arg1, %c0_i32 : i32, i32
  }
  func.func @transform_3(%arg0: i32, %arg1: i32) -> (i32, i32) {
    %c0_i32 = arith.constant 0 : i32
    %c0_i32_0 = arith.constant 0 : i32
    return %arg0, %c0_i32 : i32, i32
  }
  func.func @transform_4(%arg0: i32, %arg1: i32) -> (i32, i32) {
    %c0_i32 = arith.constant 0 : i32
    %c0_i32_0 = arith.constant 0 : i32
    return %arg0, %c0_i32 : i32, i32
  }
}

</mosaic_0001>

<llo_original>
// kernel: tpu_custom_call.1
$region0: #{tpu_custom_call.1}
  #allocation0 [shape = 'u32[]', space=smem, size = 0x4, offset = 0x4, fixed_abs, tag = 'smem constant byte address 0x4 - core index']
  #allocation1 [shape = 'u32[144,128]{1,0:T(1,128)}', space=vmem, size = 0x12000, scoped, tag = 'internal scratch']
  #allocation2 [shape = 'f32[16,1]{1,0:T(8,128)}', space=vmem, size = 0x2000, scoped, tag = 'scratch operand']
  #allocation3 [shape = 'f32[16,1]{1,0:T(8,128)}', space=vmem, size = 0x2000, scoped, tag = 'scratch operand']
  #allocation4 [shape = 'f32[16,1]{1,0:T(8,128)}', space=vmem, size = 0x2000, scoped, tag = 'scratch operand']
  #allocation5 [shape = 'f32[16,1]{1,0:T(8,128)}', space=vmem, size = 0x2000, scoped, tag = 'scratch operand']
  %s0 = inlined_call_operand.hbm [shape: bf16[16,128], index: 0, kind: input, shape index: {}]
  %s1 = inlined_call_operand.hbm [shape: bf16[16,128], index: 1, kind: input, shape index: {}]
  %s2 = inlined_call_operand.hbm [shape: bf16[32,128], index: 2, kind: input, shape index: {}]
  %s3 = inlined_call_operand.vmem [shape: f32[16,1], index: 3, kind: output, shape index: {0}]
  %s4 = inlined_call_operand.vmem [shape: f32[16,1], index: 4, kind: output, shape index: {1}]
  %5 = xla_tuple %s3, %s4
  %s6 = sld [smem:[#allocation0]]
  $region50: #{tpu_custom_call.1} parent=0
    _
  %s8 = ssub.s32 1, %s6
  %s9 = scalar_select 0, %s8, %s6
  $region1: #{tpu_custom_call.1} parent=0
    #allocation6 [shape = 'u8[4096]{0}', space=vmem, size = 0x1000, scoped, tag = 'input window, operand 0, single buffered']
    #allocation7 [shape = 's32[1]{0}', space=sflag, size = 0x4, scoped, tag = 'scoped memory for tpu_custom_call.1']
    #allocation8 [shape = 'u8[4096]{0}', space=vmem, size = 0x1000, scoped, tag = 'input window, operand 1, single buffered']
    #allocation9 [shape = 's32[1]{0}', space=sflag, size = 0x4, scoped, tag = 'scoped memory for tpu_custom_call.1']
    #allocation10 [shape = 'u8[8192]{0}', space=vmem, size = 0x2000, scoped, tag = 'input window, operand 2, single buffered']
    %10 = vsyncpa [#allocation7], 0
    %11 = vsyncpa [#allocation9], 0
    // Predicated region
    $region2: #{tpu_custom_call.1} parent=1 // pred_check
      _
    $region3: #{tpu_custom_call.1} parent=1 // pred_check_branch
      %13 = sbr.rel (0) target = $region5
    $region4: #{tpu_custom_call.1} parent=1 // pred_region
      %s15 = ssub.s32 128, 128
      %16 = vsyncadd [#allocation7], %s15
      %s17 = sshll.u32 [#allocation6], 4
      %s18 = int_to_ptr.vmem [resolvable:$true] %s17
      %23 = dma.hbm_to_vmem [thread:$0]  %s0, 128, %s18, [#allocation7], 64, 64, 4
    $region5: #{tpu_custom_call.1} parent=1 // pred_fallthru
      _
    // Predicated region
    $region6: #{tpu_custom_call.1} parent=1 // pred_check
      _
    $region7: #{tpu_custom_call.1} parent=1 // pred_check_branch
      %25 = sbr.rel (0) target = $region9
    $region8: #{tpu_custom_call.1} parent=1 // pred_region
      %s27 = ssub.s32 128, 128
      %28 = vsyncadd [#allocation9], %s27
      %s29 = sshll.u32 [#allocation8], 4
      %s30 = int_to_ptr.vmem [resolvable:$true] %s29
      %35 = dma.hbm_to_vmem [thread:$0]  %s1, 128, %s30, [#allocation9], 64, 64, 4
    $region9: #{tpu_custom_call.1} parent=1 // pred_fallthru
      _
    // Predicated region
    $region10: #{tpu_custom_call.1} parent=1 // pred_check
      _
    $region11: #{tpu_custom_call.1} parent=1 // pred_check_branch
      %37 = sbr.rel (0) target = $region13
    $region12: #{tpu_custom_call.1} parent=1 // pred_region
      %s39 = ssub.s32 256, 256
      %40 = vsyncadd [#allocation9], %s39
      %s41 = sshll.u32 [#allocation10], 4
      %s42 = int_to_ptr.vmem [resolvable:$true] %s41
      %47 = dma.hbm_to_vmem [thread:$0]  %s2, 256, %s42, [#allocation9], 64, 64, 4
    $region13: #{tpu_custom_call.1} parent=1 // pred_fallthru
      _
    // Predicated region
    $region14: #{tpu_custom_call.1} parent=1 // pred_check
      _
    $region15: #{tpu_custom_call.1} parent=1 // pred_check_branch
      %49 = sbr.rel (0) target = $region17
    $region16: #{tpu_custom_call.1} parent=1 // pred_region
      %50 = dma.done [#allocation7], 128
    $region17: #{tpu_custom_call.1} parent=1 // pred_fallthru
      _
    // Predicated region
    $region18: #{tpu_custom_call.1} parent=1 // pred_check
      _
    $region19: #{tpu_custom_call.1} parent=1 // pred_check_branch
      %52 = sbr.rel (0) target = $region21
    $region20: #{tpu_custom_call.1} parent=1 // pred_region
      %53 = dma.done [#allocation9], 128
    $region21: #{tpu_custom_call.1} parent=1 // pred_fallthru
      _
    // Predicated region
    $region22: #{tpu_custom_call.1} parent=1 // pred_check
      _
    $region23: #{tpu_custom_call.1} parent=1 // pred_check_branch
      %55 = sbr.rel (0) target = $region25
    $region24: #{tpu_custom_call.1} parent=1 // pred_region
      %56 = dma.done [#allocation9], 256
    $region25: #{tpu_custom_call.1} parent=1 // pred_fallthru
      _
    %v58 = vld [vmem:[#allocation6] sm:$0xf]
    %v59 = vld [vmem:[#allocation6 + $0x4] sm:$0xf]
    %v60 = vld [vmem:[#allocation8] sm:$0xf]
    %v61 = vld [vmem:[#allocation8 + $0x4] sm:$0xf]
    %v62 = vld [vmem:[#allocation10] sm:$0xf]
    %v63 = vld [vmem:[#allocation10 + $0x4] sm:$0xf]
    %v64 = vld [vmem:[#allocation10 + $0x8] sm:$0xf]
    %v65 = vld [vmem:[#allocation10 + $0xc] sm:$0xf]
    %v68 = vunpack.c.l.b16 %v58
    %v69 = vunpack.c.l.b16 %v59
    %v70 = vpack.c.b16 %v69, %v68
    %v76 = vunpack.c.l.b16 %v62
    %v77 = vunpack.c.l.b16 %v63
    %v78 = vunpack.c.l.b16 %v64
    %v79 = vunpack.c.l.b16 %v65
    %v80 = vpack.c.b16 %v77, %v76
    %v81 = vpack.c.b16 %v79, %v78
    %84 = vmatprep.subr.bf16.mxu0 0
    %85 = vmatpush1.bf16.xpose.msra.mxu0 0
    %86 = vmatprep.subr.bf16.mxu0 0
    %87 = vmatpush1.bf16.xpose.msra.mxu0 0
    %88 = vmatprep.subr.bf16.mxu0 0
    %89 = vmatpush1.bf16.xpose.msra.mxu0 0
    %90 = vmatprep.subr.bf16.mxu0 0
    %91 = vmatpush1.bf16.xpose.msra.mxu0 0
    %92 = vmatprep.subr.bf16.mxu0 0
    %93 = vmatpush1.bf16.xpose.msra.mxu0 0
    %94 = vmatprep.subr.bf16.mxu0 0
    %95 = vmatpush1.bf16.xpose.msra.mxu0 0
    %96 = vmatprep.subr.bf16.mxu0 0
    %97 = vmatpush1.bf16.xpose.msra.mxu0 %v81
    %98 = vmatprep.subr.bf16.mxu0 0
    %99 = vmatpush1.bf16.xpose.msra.mxu0 %v80
    %100 = vmatprep.subr.bf16.mxu0 0
    %101 = vmatpush2.bf16.xpose.msra.mxu0 0
    %102 = vmatprep.subr.bf16.mxu0 0
    %103 = vmatpush2.bf16.xpose.msra.mxu0 0
    %104 = vmatprep.subr.bf16.mxu0 0
    %105 = vmatpush2.bf16.xpose.msra.mxu0 0
    %106 = vmatprep.subr.bf16.mxu0 0
    %107 = vmatpush2.bf16.xpose.msra.mxu0 0
    %108 = vmatprep.subr.bf16.mxu0 0
    %109 = vmatpush2.bf16.xpose.msra.mxu0 0
    %110 = vmatprep.subr.bf16.mxu0 0
    %111 = vmatpush2.bf16.xpose.msra.mxu0 0
    %112 = vmatprep.subr.bf16.mxu0 0
    %113 = vmatpush2.bf16.xpose.msra.mxu0 0
    %114 = vmatprep.subr.bf16.mxu0 0
    %115 = vmatpush2.bf16.xpose.msra.mxu0 0
    %116 = vmatprep.mubr.bf16.mxu0 0
    %117 = vmatmul.mubr.bf16.gmra.mxu0 %v70
    %v118 = vpop.f32.mrf.mxu0
    %v119 = vadd.f32 0.0, %v118
    %v120 = vpop.f32.mrf.mxu0
    %v121 = vpop.f32.mrf.mxu0
    %v122 = vadd.f32 0.0, %v121
    %v123 = vpop.f32.mrf.mxu0
    %124 = vdwg.mxu0
    %v127 = vunpack.c.l.b16 %v60
    %v128 = vunpack.c.l.b16 %v61
    %v129 = vpack.c.b16 %v128, %v127
    %131 = vmatprep.subr.bf16.mxu0 0
    %132 = vmatpush1.bf16.xpose.msra.mxu0 0
    %133 = vmatprep.subr.bf16.mxu0 0
    %134 = vmatpush1.bf16.xpose.msra.mxu0 0
    %135 = vmatprep.subr.bf16.mxu0 0
    %136 = vmatpush1.bf16.xpose.msra.mxu0 0
    %137 = vmatprep.subr.bf16.mxu0 0
    %138 = vmatpush1.bf16.xpose.msra.mxu0 0
    %139 = vmatprep.subr.bf16.mxu0 0
    %140 = vmatpush1.bf16.xpose.msra.mxu0 0
    %141 = vmatprep.subr.bf16.mxu0 0
    %142 = vmatpush1.bf16.xpose.msra.mxu0 0
    %143 = vmatprep.subr.bf16.mxu0 0
    %144 = vmatpush1.bf16.xpose.msra.mxu0 %v81
    %145 = vmatprep.subr.bf16.mxu0 0
    %146 = vmatpush1.bf16.xpose.msra.mxu0 %v80
    %147 = vmatprep.subr.bf16.mxu0 0
    %148 = vmatpush2.bf16.xpose.msra.mxu0 0
    %149 = vmatprep.subr.bf16.mxu0 0
    %150 = vmatpush2.bf16.xpose.msra.mxu0 0
    %151 = vmatprep.subr.bf16.mxu0 0
    %152 = vmatpush2.bf16.xpose.msra.mxu0 0
    %153 = vmatprep.subr.bf16.mxu0 0
    %154 = vmatpush2.bf16.xpose.msra.mxu0 0
    %155 = vmatprep.subr.bf16.mxu0 0
    %156 = vmatpush2.bf16.xpose.msra.mxu0 0
    %157 = vmatprep.subr.bf16.mxu0 0
    %158 = vmatpush2.bf16.xpose.msra.mxu0 0
    %159 = vmatprep.subr.bf16.mxu0 0
    %160 = vmatpush2.bf16.xpose.msra.mxu0 0
    %161 = vmatprep.subr.bf16.mxu0 0
    %162 = vmatpush2.bf16.xpose.msra.mxu0 0
    %163 = vmatprep.mubr.bf16.mxu0 0
    %164 = vmatmul.mubr.bf16.gmra.mxu0 %v129
    %v165 = vpop.f32.mrf.mxu0
    %v166 = vadd.f32 0.0, %v165
    %v167 = vpop.f32.mrf.mxu0
    %v168 = vpop.f32.mrf.mxu0
    %v169 = vadd.f32 0.0, %v168
    %v170 = vpop.f32.mrf.mxu0
    %171 = vdwg.mxu0
    %v172 = vlaneseq
    %v173 = vand.u32 %v172, 127
    %s174 = smul.u32 0, 32
    %v175 = vstv %s174
    %v176 = vadd.s32 %v173, %v175
    %v177 = vlaneseq
    %v178 = vshrl.u32 %v177, 7
    %v179 = vadd.s32 %v178, 8
    %s180 = smul.u32 0, 16
    %v181 = vstv %s180
    %v182 = vadd.s32 %v178, %v181
    %v183 = vadd.s32 %v179, %v181
    %vm184 = vcmp.lt.s32.totalorder %v176, 4
    %vm185 = vcmp.ge.s32.totalorder %v176, 16
    %vm186 = vcmp.lt.s32.totalorder %v176, 20
    %vm187 = vmand %vm185, %vm186
    %vm188 = vmor %vm184, %vm187
    %vm189 = vcmp.ne.s32.totalorder %v176, %v182
    %vm190 = vcmp.ne.s32.totalorder %v176, %v183
    %vm191 = vmand %vm188, %vm189
    %vm192 = vmand %vm188, %vm190
    %v193 = vadd.s32 %v182, 16
    %v194 = vadd.s32 %v183, 16
    %vm195 = vcmp.ne.s32.totalorder %v176, %v193
    %vm196 = vcmp.ne.s32.totalorder %v176, %v194
    %vm197 = vmand %vm188, %vm195
    %vm198 = vmand %vm188, %vm196
    %p199 = scmp.eq.s32.totalorder 0, 0
    // Predicated region
    $region26: #{tpu_custom_call.1} parent=1 // pred_check
      %p200 = pneg %p199
    $region27: #{tpu_custom_call.1} parent=1 // pred_check_branch
      %202 = sbr.rel (%p200) target = $region29
    $region28: #{tpu_custom_call.1} parent=1 // pred_region
      %vm203 = vcmask 7168
      %204 = vst.msk [vmem:[#allocation2] sm:$0xff] %vm203, 0.0
      %205 = vst.msk [vmem:[#allocation2 + $0x8] sm:$0xff] %vm203, 0.0
      %206 = vst.msk [vmem:[#allocation3] sm:$0xff] %vm203, 0.0
      %207 = vst.msk [vmem:[#allocation3 + $0x8] sm:$0xff] %vm203, 0.0
    $region29: #{tpu_custom_call.1} parent=1 // pred_fallthru
      _
    %v208 = vsub.f32 %v119, 2.0
    %v209 = vsub.f32 %v122, 2.0
    %v210 = vmul.f32 %v208, 1.442695
    %v211 = vpow.pop %v210
    %v212 = vmul.f32 %v209, 1.442695
    %v213 = vpow.pop %v212
    %v214 = vsel %vm191, %v211, 0.0
    %v215 = vsel %vm192, %v213, 0.0
    %v216 = vsub.f32 %v166, 2.0
    %v217 = vsub.f32 %v169, 2.0
    %v218 = vmul.f32 %v216, 1.442695
    %v219 = vpow.pop %v218
    %v220 = vmul.f32 %v217, 1.442695
    %v221 = vpow.pop %v220
    %v222 = vsel %vm197, %v219, 0.0
    %v223 = vsel %vm198, %v221, 0.0
    %v224 = vld [vmem:[#allocation2] sm:$0xff]
    %v225 = vld [vmem:[#allocation2 + $0x8] sm:$0xff]
    %vm226 = vcmask 261120
    %v227 = vsel %vm226, %v214, 0.0
    %228 = vadd.xlane.f32.xlu0 %v227
    %v229 = vpop.xlane.xlu0 %228
    %v230 = vsel %vm226, %v215, 0.0
    %231 = vadd.xlane.f32.xlu0 %v230
    %v232 = vpop.xlane.xlu0 %231
    %v233 = vadd.f32 %v224, %v229
    %v234 = vadd.f32 %v225, %v232
    %vm235 = vcmask 7168
    %236 = vst.msk [vmem:[#allocation2] sm:$0xff] %vm235, %v233
    %237 = vst.msk [vmem:[#allocation2 + $0x8] sm:$0xff] %vm235, %v234
    %v238 = vld [vmem:[#allocation3] sm:$0xff]
    %v239 = vld [vmem:[#allocation3 + $0x8] sm:$0xff]
    %v240 = vsel %vm226, %v222, 0.0
    %241 = vadd.xlane.f32.xlu0 %v240
    %v242 = vpop.xlane.xlu0 %241
    %v243 = vsel %vm226, %v223, 0.0
    %244 = vadd.xlane.f32.xlu0 %v243
    %v245 = vpop.xlane.xlu0 %244
    %v246 = vadd.f32 %v238, %v242
    %v247 = vadd.f32 %v239, %v245
    %248 = vst.msk [vmem:[#allocation3] sm:$0xff] %vm235, %v246
    %249 = vst.msk [vmem:[#allocation3 + $0x8] sm:$0xff] %vm235, %v247
    // Predicated region
    $region30: #{tpu_custom_call.1} parent=1 // pred_check
      %p250 = pneg %p199
    $region31: #{tpu_custom_call.1} parent=1 // pred_check_branch
      %252 = sbr.rel (%p250) target = $region33
    $region32: #{tpu_custom_call.1} parent=1 // pred_region
      %v253 = vunpack.c.l.bf16 %v58
      %v254 = vunpack.c.l.bf16 %v59
      %v255 = vunpack.c.l.bf16 %v60
      %v256 = vunpack.c.l.bf16 %v61
      %v257 = vmul.f32 %v253, %v255
      %v258 = vmul.f32 %v254, %v256
      %259 = vadd.xlane.f32.xlu0 %v257
      %v260 = vpop.xlane.xlu0 %259
      %261 = vadd.xlane.f32.xlu0 %v258
      %v262 = vpop.xlane.xlu0 %261
      %v263 = vmul.f32 %v260, 2.0
      %v264 = vmul.f32 %v262, 2.0
      %v265 = vld [vmem:[#allocation2] sm:$0xff]
      %v266 = vld [vmem:[#allocation2 + $0x8] sm:$0xff]
      %v267 = vmax.f32 %v265, 1e-37
      %v268 = vmax.f32 %v266, 1e-37
      %v269 = vlog2.pop %v267
      %v270 = vmul.f32 %v269, 0.6931472
      %v271 = vlog2.pop %v268
      %v272 = vmul.f32 %v271, 0.6931472
      %v273 = vadd.f32 %v270, 2.0
      %v274 = vadd.f32 %v272, 2.0
      %v275 = vld [vmem:[#allocation3] sm:$0xff]
      %v276 = vld [vmem:[#allocation3 + $0x8] sm:$0xff]
      %v277 = vmax.f32 %v275, 1e-37
      %v278 = vmax.f32 %v276, 1e-37
      %v279 = vlog2.pop %v277
      %v280 = vmul.f32 %v279, 0.6931472
      %v281 = vlog2.pop %v278
      %v282 = vmul.f32 %v281, 0.6931472
      %v283 = vadd.f32 %v280, 2.0
      %v284 = vadd.f32 %v282, 2.0
      %vm285 = vcmp.lt.s32.totalorder %v182, 4
      %vm286 = vcmp.lt.s32.totalorder %v183, 4
      %v287 = vsub.f32 %v273, %v263
      %v288 = vsub.f32 %v274, %v264
      %v289 = vsel %vm285, %v287, 0.0
      %v290 = vsel %vm286, %v288, 0.0
      %291 = vst.msk [vmem:[%s3] sm:$0xff] %vm235, %v289
      %292 = vst.msk [vmem:[%s3 + $0x8] sm:$0xff] %vm235, %v290
      %v293 = vsub.f32 %v283, %v263
      %v294 = vsub.f32 %v284, %v264
      %v295 = vsel %vm285, %v293, 0.0
      %v296 = vsel %vm286, %v294, 0.0
      %297 = vst.msk [vmem:[%s4] sm:$0xff] %vm235, %v295
      %298 = vst.msk [vmem:[%s4 + $0x8] sm:$0xff] %vm235, %v296
    $region33: #{tpu_custom_call.1} parent=1 // pred_fallthru
      _
    // Predicated region
    $region34: #{tpu_custom_call.1} parent=1 // pred_check
      _
    $region35: #{tpu_custom_call.1} parent=1 // pred_check_branch
      %300 = sbr.rel (0) target = $region37
    $region36: #{tpu_custom_call.1} parent=1 // pred_region
      _
    $region37: #{tpu_custom_call.1} parent=1 // pred_fallthru
      _
    // Predicated region
    $region38: #{tpu_custom_call.1} parent=1 // pred_check
      _
    $region39: #{tpu_custom_call.1} parent=1 // pred_check_branch
      %302 = sbr.rel (0) target = $region41
    $region40: #{tpu_custom_call.1} parent=1 // pred_region
      _
    $region41: #{tpu_custom_call.1} parent=1 // pred_fallthru
      _
    // Predicated region
    $region42: #{tpu_custom_call.1} parent=1 // pred_check
      _
    $region43: #{tpu_custom_call.1} parent=1 // pred_check_branch
      %304 = sbr.rel (0) target = $region45
    $region44: #{tpu_custom_call.1} parent=1 // pred_region
      _
    $region45: #{tpu_custom_call.1} parent=1 // pred_fallthru
      _
    // Predicated region
    $region46: #{tpu_custom_call.1} parent=1 // pred_check
      _
    $region47: #{tpu_custom_call.1} parent=1 // pred_check_branch
      %306 = sbr.rel (0) target = $region49
    $region48: #{tpu_custom_call.1} parent=1 // pred_region
      _
    $region49: #{tpu_custom_call.1} parent=1 // pred_fallthru
      _
    %307 = vsyncpa [#allocation7], 1
    %308 = vsyncpa [#allocation9], 1

</llo_original>
